<compile_context>
chip_gen: v5e
topology: v5e:2x2
jax: 0.10.0
libtpu: 0.0.40
codegen_flags: <defaults>
</compile_context>

<pallas_src>
import functools

import jax
import jax.numpy as jnp
from jax import lax
from jax.experimental import pallas as pl
from jax.experimental.pallas import tpu as pltpu

LANE = 128  # TPU lane width; all feature axes are zero-padded to this.


def _vae_kernel(x_ref, w1_ref, b1_ref, gamma_ref, beta_ref,
                wh_ref, bh_ref, w3_ref, b3_ref, w4_ref, b4_ref,
                eps_ref, mask_ref,
                z_ref, y_ref,
                *, x_dim: int, z_dim: int):
    x = x_ref[...]                      # [B, LANE], real data in cols [:x_dim]
    B = x.shape[0]

    # ---- encoder: fc1 + relu ------------------------------------------------
    h = jnp.dot(x, w1_ref[...], preferred_element_type=jnp.float32) + b1_ref[...]
    h = jnp.maximum(h, 0.0)

    # BatchNorm1d, training mode: per-feature batch mean / biased batch var.
    mu = jnp.mean(h, axis=0, keepdims=True)
    diff = h - mu
    var = jnp.mean(diff * diff, axis=0, keepdims=True)
    h = diff * lax.rsqrt(var + 1e-5) * gamma_ref[...] + beta_ref[...]

    # Fused mean/log_var head: ONE MXU pass over the [LANE, 2*LANE] weight.
    # Split is on a 128-lane tile boundary -> clean slices, no relayout.
    mv = jnp.dot(h, wh_ref[...], preferred_element_type=jnp.float32) + bh_ref[...]
    mean = mv[:, :LANE]       # real values in cols [:z_dim], zeros elsewhere
    log_var = mv[:, LANE:]    # real values in cols [:z_dim], zeros elsewhere

    # ---- KL term + reparameterization sample ---------------------------------
    std = jnp.exp(0.5 * log_var)        # computed once; std*std == exp(log_var)
    # Padded columns contribute 1 + 0 - 0 - 1 = 0, so the unmasked sum is exact.
    kl = 0.5 * jnp.sum(1.0 + log_var - mean * mean - std * std)
    z = mean + eps_ref[...] * std       # [B, LANE]; zeros in padded columns

    # ---- decoder --------------------------------------------------------------
    yh = jnp.dot(z, w3_ref[...], preferred_element_type=jnp.float32) + b3_ref[...]
    yh = jnp.maximum(yh, 0.0)
    yh = yh * mask_ref[...]             # inverted dropout (mask pre-scaled 1/(1-p))
    logits = jnp.dot(yh, w4_ref[...], preferred_element_type=jnp.float32) + b4_ref[...]

    # ---- reconstruction term from logits --------------------------------------
    # x*log(y) + (1-x)*log(1-y) == x*logits - softplus(logits)
    sp = jnp.maximum(logits, 0.0) + jnp.log(1.0 + jnp.exp(-jnp.abs(logits)))
    col = lax.broadcasted_iota(jnp.int32, (B, LANE), 1)
    real_x = col < x_dim                # mask out padded feature columns
    recon = jnp.sum(x * logits - jnp.where(real_x, sp, 0.0)) / (B * x_dim)

    loss = -(kl + recon)

    # ---- lane-dense outputs (full [B, 128] unmasked stores) --------------------
    # sigmoid(logits) == exp(logits - softplus(logits)) exactly (no divide).
    y_ref[...] = jnp.exp(logits - sp)
    # Fold the scalar loss into lane `z_dim` of the z slab (that column of z is
    # guaranteed zero by construction); the wrapper reads it back from [0, z_dim].
    z_ref[...] = z + jnp.where(col == z_dim, loss, 0.0)


def _vmem():
    return pl.BlockSpec(memory_space=pltpu.MemorySpace.VMEM)


@functools.partial(jax.jit, static_argnames=("x_dim", "z_dim"))
def vae_forward(x, params, eps, drop_mask, *, x_dim, z_dim):
    """Full VAE forward pass in a single Pallas kernel invocation.

    Returns (-ELBO scalar, z [B, z_dim], y [B, x_dim]).
    """
    B = x.shape[0]
    f32 = jnp.float32

    # Zero-pad per-call activations to the 128-lane width (params are padded
    # once in init_params).  Padded eps columns are zero => padded z cols are 0.
    x_p = jnp.pad(x.astype(f32), ((0, 0), (0, LANE - x_dim)))
    eps_p = jnp.pad(eps.astype(f32), ((0, 0), (0, LANE - z_dim)))
    mask_p = jnp.pad(drop_mask.astype(f32),
                     ((0, 0), (0, LANE - drop_mask.shape[1])))

    kernel = functools.partial(_vae_kernel, x_dim=x_dim, z_dim=z_dim)

    z_slab, y_slab = pl.pallas_call(
        kernel,
        out_shape=(
            jax.ShapeDtypeStruct((B, LANE), f32),   # z in cols [:z_dim], loss at col z_dim
            jax.ShapeDtypeStruct((B, LANE), f32),   # y in cols [:x_dim]
        ),
        in_specs=[_vmem()] * 13,
        out_specs=(_vmem(), _vmem()),
    )(
        x_p,
        params["w1"], params["b1"], params["gamma"], params["beta"],
        params["whead"], params["bhead"],
        params["w3"], params["b3"], params["w4"], params["b4"],
        eps_p, mask_p,
    )

    loss = z_slab[0, z_dim]
    z = z_slab[:, :z_dim]
    y = y_slab[:, :x_dim]
    return loss, z, y


def init_params(key, x_dim, z_dim, hidden=20):
    """Deterministic parameter init (PyTorch-style), zero-padded to 128 lanes."""
    ks = jax.random.split(key, 10)
    f32 = jnp.float32

    def lin(kw, kb, fan_in, fan_out):
        bound = 1.0 / jnp.sqrt(fan_in)
        w = jax.random.uniform(kw, (fan_in, fan_out), f32, -bound, bound)
        b = jax.random.uniform(kb, (1, fan_out), f32, -bound, bound)
        return w, b

    w1, b1 = lin(ks[0], ks[1], x_dim, hidden)
    wm, bm = lin(ks[2], ks[3], hidden, z_dim)
    wv, bv = lin(ks[4], ks[5], hidden, z_dim)
    w3, b3 = lin(ks[6], ks[7], z_dim, hidden)
    w4, b4 = lin(ks[8], ks[9], hidden, x_dim)

    def pad2(w, rows, cols):
        return jnp.zeros((rows, cols), f32).at[:w.shape[0], :w.shape[1]].set(w)

    # Fused encoder head: wm in lanes [0, z_dim), wv in lanes [LANE, LANE+z_dim),
    # so the in-kernel split lands on a 128-lane tile boundary.
    whead = jnp.zeros((LANE, 2 * LANE), f32)
    whead = whead.at[:hidden, :z_dim].set(wm)
    whead = whead.at[:hidden, LANE:LANE + z_dim].set(wv)
    bhead = jnp.zeros((1, 2 * LANE), f32)
    bhead = bhead.at[:, :z_dim].set(bm)
    bhead = bhead.at[:, LANE:LANE + z_dim].set(bv)

    gamma = jnp.zeros((1, LANE), f32).at[:, :hidden].set(1.0)  # BN weight init
    beta = jnp.zeros((1, LANE), f32)                           # BN bias init

    return {
        "w1": pad2(w1, LANE, LANE), "b1": pad2(b1, 1, LANE),
        "gamma": gamma, "beta": beta,
        "whead": whead, "bhead": bhead,
        "w3": pad2(w3, LANE, LANE), "b3": pad2(b3, 1, LANE),
        "w4": pad2(w4, LANE, LANE), "b4": pad2(b4, 1, LANE),
    }


if __name__ == "__main__":
    x_dim, z_dim, hidden, batch = 16, 4, 20, 8

    root = jax.random.PRNGKey(0)
    k_param, k_x, k_eps, k_drop = jax.random.split(root, 4)

    params = init_params(k_param, x_dim, z_dim, hidden)

    # "image-like" input in [0,1] (matches the Bernoulli reconstruction loss)
    x = jax.random.uniform(k_x, (batch, x_dim), jnp.float32)

    # torch.randn equivalent for the reparameterization trick
    eps = jax.random.normal(k_eps, (batch, z_dim), jnp.float32)

    # Dropout(p=0.2) train-mode keep-mask, pre-scaled by 1/(1-p)
    p = 0.2
    keep = (jax.random.uniform(k_drop, (batch, hidden), jnp.float32) >= p)
    drop_mask = keep.astype(jnp.float32) / (1.0 - p)

    loss, z, y = vae_forward(x, params, eps, drop_mask, x_dim=x_dim, z_dim=z_dim)
    jax.block_until_ready((loss, z, y))

    assert z.shape == (batch, z_dim)
    assert y.shape == (batch, x_dim)
    assert bool(jnp.isfinite(loss))
    assert bool(jnp.all(jnp.isfinite(z)))
    assert bool(jnp.all(jnp.isfinite(y)))

    print("KERNEL_OK")
</pallas_src>

<mosaic_0001>
module attributes {stable_mosaic.version = 11 : i64} {
  func.func @_vae_kernel(%arg0: memref<8x128xf32, #tpu.memory_space<vmem>>, %arg1: memref<128x128xf32, #tpu.memory_space<vmem>>, %arg2: memref<1x128xf32, #tpu.memory_space<vmem>>, %arg3: memref<1x128xf32, #tpu.memory_space<vmem>>, %arg4: memref<1x128xf32, #tpu.memory_space<vmem>>, %arg5: memref<128x256xf32, #tpu.memory_space<vmem>>, %arg6: memref<1x256xf32, #tpu.memory_space<vmem>>, %arg7: memref<128x128xf32, #tpu.memory_space<vmem>>, %arg8: memref<1x128xf32, #tpu.memory_space<vmem>>, %arg9: memref<128x128xf32, #tpu.memory_space<vmem>>, %arg10: memref<1x128xf32, #tpu.memory_space<vmem>>, %arg11: memref<8x128xf32, #tpu.memory_space<vmem>>, %arg12: memref<8x128xf32, #tpu.memory_space<vmem>>, %arg13: memref<8x128xf32, #tpu.memory_space<vmem>>, %arg14: memref<8x128xf32, #tpu.memory_space<vmem>>) attributes {dimension_semantics = [], scalar_prefetch = 0 : i64, scratch_operands = 0 : i64, tpu.core_type = #tpu.core_type<tc>} {
    %c0 = arith.constant 0 : index
    %c0_0 = arith.constant 0 : index
    %0 = vector.load %arg0[%c0, %c0_0] : memref<8x128xf32, #tpu.memory_space<vmem>>, vector<8x128xf32>
    %c0_1 = arith.constant 0 : index
    %c0_2 = arith.constant 0 : index
    %1 = vector.load %arg1[%c0_1, %c0_2] : memref<128x128xf32, #tpu.memory_space<vmem>>, vector<128x128xf32>
    %cst = arith.constant dense<0.000000e+00> : vector<8x128xf32>
    %2 = tpu.matmul %0, %1, %cst {dimension_numbers = #tpu.dot_dimension_numbers<[1], [0], [0], [1], [0, 0, 1, 1], [], []>} : vector<8x128xf32>, vector<128x128xf32>, vector<8x128xf32> -> vector<8x128xf32>
    %c0_3 = arith.constant 0 : index
    %c0_4 = arith.constant 0 : index
    %3 = vector.load %arg2[%c0_3, %c0_4] : memref<1x128xf32, #tpu.memory_space<vmem>>, vector<1x128xf32>
    %4 = vector.broadcast %3 : vector<1x128xf32> to vector<8x128xf32>
    %5 = arith.addf %2, %4 : vector<8x128xf32>
    %cst_5 = arith.constant 0.000000e+00 : f32
    %6 = vector.broadcast %cst_5 : f32 to vector<8x128xf32>
    %7 = arith.maximumf %5, %6 : vector<8x128xf32>
    %cst_6 = arith.constant dense<0.000000e+00> : vector<128xf32>
    %8 = vector.multi_reduction <add>, %7, %cst_6 [0] : vector<8x128xf32> to vector<128xf32>
    %9 = vector.shape_cast %8 : vector<128xf32> to vector<1x128xf32>
    %cst_7 = arith.constant 8.000000e+00 : f32
    %10 = vector.broadcast %cst_7 : f32 to vector<1x128xf32>
    %11 = arith.divf %9, %10 : vector<1x128xf32>
    %12 = vector.broadcast %11 : vector<1x128xf32> to vector<8x128xf32>
    %13 = arith.subf %7, %12 : vector<8x128xf32>
    %14 = arith.mulf %13, %13 : vector<8x128xf32>
    %cst_8 = arith.constant dense<0.000000e+00> : vector<128xf32>
    %15 = vector.multi_reduction <add>, %14, %cst_8 [0] : vector<8x128xf32> to vector<128xf32>
    %16 = vector.shape_cast %15 : vector<128xf32> to vector<1x128xf32>
    %cst_9 = arith.constant 8.000000e+00 : f32
    %17 = vector.broadcast %cst_9 : f32 to vector<1x128xf32>
    %18 = arith.divf %16, %17 : vector<1x128xf32>
    %cst_10 = arith.constant 9.99999974E-6 : f32
    %19 = vector.broadcast %cst_10 : f32 to vector<1x128xf32>
    %20 = arith.addf %18, %19 : vector<1x128xf32>
    %21 = math.rsqrt %20 : vector<1x128xf32>
    %22 = vector.broadcast %21 : vector<1x128xf32> to vector<8x128xf32>
    %23 = arith.mulf %13, %22 : vector<8x128xf32>
    %c0_11 = arith.constant 0 : index
    %c0_12 = arith.constant 0 : index
    %24 = vector.load %arg3[%c0_11, %c0_12] : memref<1x128xf32, #tpu.memory_space<vmem>>, vector<1x128xf32>
    %25 = vector.broadcast %24 : vector<1x128xf32> to vector<8x128xf32>
    %26 = arith.mulf %23, %25 : vector<8x128xf32>
    %c0_13 = arith.constant 0 : index
    %c0_14 = arith.constant 0 : index
    %27 = vector.load %arg4[%c0_13, %c0_14] : memref<1x128xf32, #tpu.memory_space<vmem>>, vector<1x128xf32>
    %28 = vector.broadcast %27 : vector<1x128xf32> to vector<8x128xf32>
    %29 = arith.addf %26, %28 : vector<8x128xf32>
    %c0_15 = arith.constant 0 : index
    %c0_16 = arith.constant 0 : index
    %30 = vector.load %arg5[%c0_15, %c0_16] : memref<128x256xf32, #tpu.memory_space<vmem>>, vector<128x256xf32>
    %cst_17 = arith.constant dense<0.000000e+00> : vector<8x256xf32>
    %31 = tpu.matmul %29, %30, %cst_17 {dimension_numbers = #tpu.dot_dimension_numbers<[1], [0], [0], [1], [0, 0, 1, 1], [], []>} : vector<8x128xf32>, vector<128x256xf32>, vector<8x256xf32> -> vector<8x256xf32>
    %c0_18 = arith.constant 0 : index
    %c0_19 = arith.constant 0 : index
    %32 = vector.load %arg6[%c0_18, %c0_19] : memref<1x256xf32, #tpu.memory_space<vmem>>, vector<1x256xf32>
    %33 = vector.broadcast %32 : vector<1x256xf32> to vector<8x256xf32>
    %34 = arith.addf %31, %33 : vector<8x256xf32>
    %35 = vector.extract_strided_slice %34 {offsets = [0, 0], sizes = [8, 128], strides = [1, 1]} : vector<8x256xf32> to vector<8x128xf32>
    %36 = vector.extract_strided_slice %34 {offsets = [0, 128], sizes = [8, 128], strides = [1, 1]} : vector<8x256xf32> to vector<8x128xf32>
    %cst_20 = arith.constant 5.000000e-01 : f32
    %37 = vector.broadcast %cst_20 : f32 to vector<8x128xf32>
    %38 = arith.mulf %37, %36 : vector<8x128xf32>
    %39 = math.exp %38 : vector<8x128xf32>
    %cst_21 = arith.constant 1.000000e+00 : f32
    %40 = vector.broadcast %cst_21 : f32 to vector<8x128xf32>
    %41 = arith.addf %40, %36 : vector<8x128xf32>
    %42 = arith.mulf %35, %35 : vector<8x128xf32>
    %43 = arith.subf %41, %42 : vector<8x128xf32>
    %44 = arith.mulf %39, %39 : vector<8x128xf32>
    %45 = arith.subf %43, %44 : vector<8x128xf32>
    %46 = vector.shape_cast %45 : vector<8x128xf32> to vector<1x8x128xf32>
    %cst_22 = arith.constant dense<0.000000e+00> : vector<1xf32>
    %47 = vector.multi_reduction <add>, %46, %cst_22 [1, 2] : vector<1x8x128xf32> to vector<1xf32>
    %48 = vector.shape_cast %47 : vector<1xf32> to vector<1x1x1xf32>
    %49 = vector.extract %48[0, 0, 0] : f32 from vector<1x1x1xf32>
    %cst_23 = arith.constant 5.000000e-01 : f32
    %50 = arith.mulf %cst_23, %49 : f32
    %c0_24 = arith.constant 0 : index
    %c0_25 = arith.constant 0 : index
    %51 = vector.load %arg11[%c0_24, %c0_25] : memref<8x128xf32, #tpu.memory_space<vmem>>, vector<8x128xf32>
    %52 = arith.mulf %51, %39 : vector<8x128xf32>
    %53 = arith.addf %35, %52 : vector<8x128xf32>
    %c0_26 = arith.constant 0 : index
    %c0_27 = arith.constant 0 : index
    %54 = vector.load %arg7[%c0_26, %c0_27] : memref<128x128xf32, #tpu.memory_space<vmem>>, vector<128x128xf32>
    %cst_28 = arith.constant dense<0.000000e+00> : vector<8x128xf32>
    %55 = tpu.matmul %53, %54, %cst_28 {dimension_numbers = #tpu.dot_dimension_numbers<[1], [0], [0], [1], [0, 0, 1, 1], [], []>} : vector<8x128xf32>, vector<128x128xf32>, vector<8x128xf32> -> vector<8x128xf32>
    %c0_29 = arith.constant 0 : index
    %c0_30 = arith.constant 0 : index
    %56 = vector.load %arg8[%c0_29, %c0_30] : memref<1x128xf32, #tpu.memory_space<vmem>>, vector<1x128xf32>
    %57 = vector.broadcast %56 : vector<1x128xf32> to vector<8x128xf32>
    %58 = arith.addf %55, %57 : vector<8x128xf32>
    %cst_31 = arith.constant 0.000000e+00 : f32
    %59 = vector.broadcast %cst_31 : f32 to vector<8x128xf32>
    %60 = arith.maximumf %58, %59 : vector<8x128xf32>
    %c0_32 = arith.constant 0 : index
    %c0_33 = arith.constant 0 : index
    %61 = vector.load %arg12[%c0_32, %c0_33] : memref<8x128xf32, #tpu.memory_space<vmem>>, vector<8x128xf32>
    %62 = arith.mulf %60, %61 : vector<8x128xf32>
    %c0_34 = arith.constant 0 : index
    %c0_35 = arith.constant 0 : index
    %63 = vector.load %arg9[%c0_34, %c0_35] : memref<128x128xf32, #tpu.memory_space<vmem>>, vector<128x128xf32>
    %cst_36 = arith.constant dense<0.000000e+00> : vector<8x128xf32>
    %64 = tpu.matmul %62, %63, %cst_36 {dimension_numbers = #tpu.dot_dimension_numbers<[1], [0], [0], [1], [0, 0, 1, 1], [], []>} : vector<8x128xf32>, vector<128x128xf32>, vector<8x128xf32> -> vector<8x128xf32>
    %c0_37 = arith.constant 0 : index
    %c0_38 = arith.constant 0 : index
    %65 = vector.load %arg10[%c0_37, %c0_38] : memref<1x128xf32, #tpu.memory_space<vmem>>, vector<1x128xf32>
    %66 = vector.broadcast %65 : vector<1x128xf32> to vector<8x128xf32>
    %67 = arith.addf %64, %66 : vector<8x128xf32>
    %cst_39 = arith.constant 0.000000e+00 : f32
    %68 = vector.broadcast %cst_39 : f32 to vector<8x128xf32>
    %69 = arith.maximumf %67, %68 : vector<8x128xf32>
    %70 = math.absf %67 : vector<8x128xf32>
    %cst_40 = arith.constant 0.000000e+00 : f32
    %71 = vector.broadcast %cst_40 : f32 to vector<8x128xf32>
    %72 = arith.subf %71, %70 : vector<8x128xf32>
    %73 = math.exp %72 : vector<8x128xf32>
    %cst_41 = arith.constant 1.000000e+00 : f32
    %74 = vector.broadcast %cst_41 : f32 to vector<8x128xf32>
    %75 = arith.addf %74, %73 : vector<8x128xf32>
    %76 = math.log %75 : vector<8x128xf32>
    %77 = arith.addf %69, %76 : vector<8x128xf32>
    %78 = tpu.iota {dimensions = array<i32: 1>} : vector<8x128xi32>
    %c16_i32 = arith.constant 16 : i32
    %79 = vector.broadcast %c16_i32 : i32 to vector<8x128xi32>
    %80 = arith.cmpi slt, %78, %79 : vector<8x128xi32>
    %81 = arith.mulf %0, %67 : vector<8x128xf32>
    %cst_42 = arith.constant 0.000000e+00 : f32
    %82 = vector.broadcast %cst_42 : f32 to vector<8x128xf32>
    %83 = arith.select %80, %77, %82 : vector<8x128xi1>, vector<8x128xf32>
    %84 = arith.subf %81, %83 : vector<8x128xf32>
    %85 = vector.shape_cast %84 : vector<8x128xf32> to vector<1x8x128xf32>
    %cst_43 = arith.constant dense<0.000000e+00> : vector<1xf32>
    %86 = vector.multi_reduction <add>, %85, %cst_43 [1, 2] : vector<1x8x128xf32> to vector<1xf32>
    %87 = vector.shape_cast %86 : vector<1xf32> to vector<1x1x1xf32>
    %88 = vector.extract %87[0, 0, 0] : f32 from vector<1x1x1xf32>
    %cst_44 = arith.constant 1.280000e+02 : f32
    %89 = arith.divf %88, %cst_44 : f32
    %90 = arith.addf %50, %89 : f32
    %cst_45 = arith.constant 0.000000e+00 : f32
    %91 = arith.subf %cst_45, %90 : f32
    %92 = arith.subf %67, %77 : vector<8x128xf32>
    %93 = math.exp %92 : vector<8x128xf32>
    %c0_46 = arith.constant 0 : index
    %c0_47 = arith.constant 0 : index
    %94 = vector.load %arg14[%c0_46, %c0_47] : memref<8x128xf32, #tpu.memory_space<vmem>>, vector<8x128xf32>
    tpu.vector_store %arg14[%c0_46, %c0_47], %93 {strides = array<i32>} : memref<8x128xf32, #tpu.memory_space<vmem>>, vector<8x128xf32>,
    %c4_i32 = arith.constant 4 : i32
    %95 = vector.broadcast %c4_i32 : i32 to vector<8x128xi32>
    %96 = arith.cmpi eq, %78, %95 : vector<8x128xi32>
    %cst_48 = arith.constant 0.000000e+00 : f32
    %97 = vector.broadcast %91 : f32 to vector<8x128xf32>
    %98 = vector.broadcast %cst_48 : f32 to vector<8x128xf32>
    %99 = arith.select %96, %97, %98 : vector<8x128xi1>, vector<8x128xf32>
    %100 = arith.addf %53, %99 : vector<8x128xf32>
    %c0_49 = arith.constant 0 : index
    %c0_50 = arith.constant 0 : index
    %101 = vector.load %arg13[%c0_49, %c0_50] : memref<8x128xf32, #tpu.memory_space<vmem>>, vector<8x128xf32>
    tpu.vector_store %arg13[%c0_49, %c0_50], %100 {strides = array<i32>} : memref<8x128xf32, #tpu.memory_space<vmem>>, vector<8x128xf32>,
    return
  }
}

</mosaic_0001>

<llo_original>
// kernel: vae_forward.1
$region0: #{vae_forward.1}
  #allocation0 [shape = 'u32[]', space=smem, size = 0x4, offset = 0x4, fixed_abs, tag = 'smem constant byte address 0x4 - core index']
  #allocation1 [shape = 'u32[72,128]{1,0:T(1,128)}', space=vmem, size = 0x9000, scoped, tag = 'internal scratch']
  %s0 = inlined_call_operand.vmem [shape: f32[8,128], index: 0, kind: input, shape index: {}]
  %s1 = inlined_call_operand.hbm [shape: f32[128,128], index: 1, kind: input, shape index: {}]
  %s2 = inlined_call_operand.vmem [shape: f32[1,128], index: 2, kind: input, shape index: {}]
  %s3 = inlined_call_operand.vmem [shape: f32[1,128], index: 3, kind: input, shape index: {}]
  %s4 = inlined_call_operand.vmem [shape: f32[1,128], index: 4, kind: input, shape index: {}]
  %s5 = inlined_call_operand.hbm [shape: f32[128,256], index: 5, kind: input, shape index: {}]
  %s6 = inlined_call_operand.vmem [shape: f32[1,256], index: 6, kind: input, shape index: {}]
  %s7 = inlined_call_operand.hbm [shape: f32[128,128], index: 7, kind: input, shape index: {}]
  %s8 = inlined_call_operand.vmem [shape: f32[1,128], index: 8, kind: input, shape index: {}]
  %s9 = inlined_call_operand.hbm [shape: f32[128,128], index: 9, kind: input, shape index: {}]
  %s10 = inlined_call_operand.vmem [shape: f32[1,128], index: 10, kind: input, shape index: {}]
  %s11 = inlined_call_operand.vmem [shape: f32[8,128], index: 11, kind: input, shape index: {}]
  %s12 = inlined_call_operand.vmem [shape: f32[8,128], index: 12, kind: input, shape index: {}]
  %s13 = inlined_call_operand.vmem [shape: f32[8,128], index: 13, kind: output, shape index: {0}]
  %s14 = inlined_call_operand.hbm [shape: f32[8,128], index: 14, kind: output, shape index: {1}]
  %15 = xla_tuple %s13, %s14
  %s16 = sld [smem:[#allocation0]]
  $region86: #{vae_forward.1} parent=0
    _
  %s18 = ssub.s32 1, %s16
  %s19 = scalar_select 0, %s18, %s16
  $region1: #{vae_forward.1} parent=0
    #allocation2 [shape = 'u8[65536]{0}', space=vmem, size = 0x10000, scoped, tag = 'input window, operand 1, single buffered']
    #allocation3 [shape = 's32[1]{0}', space=sflag, size = 0x4, scoped, tag = 'scoped memory for vae_forward.1']
    #allocation4 [shape = 's32[1]{0}', space=sflag, size = 0x4, scoped, tag = 'scoped memory for vae_forward.1']
    #allocation5 [shape = 'u8[131072]{0}', space=vmem, size = 0x20000, scoped, tag = 'input window, operand 5, single buffered']
    #allocation6 [shape = 's32[1]{0}', space=sflag, size = 0x4, scoped, tag = 'scoped memory for vae_forward.1']
    #allocation7 [shape = 'u8[65536]{0}', space=vmem, size = 0x10000, scoped, tag = 'input window, operand 7, single buffered']
    #allocation8 [shape = 'u8[65536]{0}', space=vmem, size = 0x10000, scoped, tag = 'input window, operand 9, single buffered']
    #allocation9 [shape = 's32[1]{0}', space=sflag, size = 0x4, scoped, tag = 'scoped memory for vae_forward.1']
    #allocation10 [shape = 'u8[4096]{0}', space=vmem, size = 0x1000, scoped, tag = 'output window, operand 1, single buffered']
    %20 = vsyncpa [#allocation3], 0
    %21 = vsyncpa [#allocation6], 0
    %22 = vsyncpa [#allocation9], 0
    %23 = vsyncpa [#allocation4], 0
    // Predicated region
    $region2: #{vae_forward.1} parent=1 // pred_check
      _
    $region3: #{vae_forward.1} parent=1 // pred_check_branch
      %25 = sbr.rel (0) target = $region5
    $region4: #{vae_forward.1} parent=1 // pred_region
      _
    $region5: #{vae_forward.1} parent=1 // pred_fallthru
      _
    // Predicated region
    $region6: #{vae_forward.1} parent=1 // pred_check
      _
    $region7: #{vae_forward.1} parent=1 // pred_check_branch
      %27 = sbr.rel (0) target = $region9
    $region8: #{vae_forward.1} parent=1 // pred_region
      %29 = vsyncadd [#allocation3], 0
      %s30 = sshll.u32 %s1, 4
      %s31 = int_to_ptr.hbm [resolvable:$true] %s30
      %s32 = sshll.u32 [#allocation2], 4
      %s33 = int_to_ptr.vmem [resolvable:$true] %s32
      %38 = dma.hbm_to_vmem [thread:$0]  %s31, 2048, %s33, [#allocation3], 128, 128, 8
    $region9: #{vae_forward.1} parent=1 // pred_fallthru
      _
    // Predicated region
    $region10: #{vae_forward.1} parent=1 // pred_check
      _
    $region11: #{vae_forward.1} parent=1 // pred_check_branch
      %40 = sbr.rel (0) target = $region13
    $region12: #{vae_forward.1} parent=1 // pred_region
      _
    $region13: #{vae_forward.1} parent=1 // pred_fallthru
      _
    // Predicated region
    $region14: #{vae_forward.1} parent=1 // pred_check
      _
    $region15: #{vae_forward.1} parent=1 // pred_check_branch
      %42 = sbr.rel (0) target = $region17
    $region16: #{vae_forward.1} parent=1 // pred_region
      _
    $region17: #{vae_forward.1} parent=1 // pred_fallthru
      _
    // Predicated region
    $region18: #{vae_forward.1} parent=1 // pred_check
      _
    $region19: #{vae_forward.1} parent=1 // pred_check_branch
      %44 = sbr.rel (0) target = $region21
    $region20: #{vae_forward.1} parent=1 // pred_region
      _
    $region21: #{vae_forward.1} parent=1 // pred_fallthru
      _
    // Predicated region
    $region22: #{vae_forward.1} parent=1 // pred_check
      _
    $region23: #{vae_forward.1} parent=1 // pred_check_branch
      %46 = sbr.rel (0) target = $region25
    $region24: #{vae_forward.1} parent=1 // pred_region
      %48 = vsyncadd [#allocation6], 0
      %s49 = sshll.u32 %s5, 4
      %s50 = int_to_ptr.hbm [resolvable:$true] %s49
      %s51 = sshll.u32 [#allocation5], 4
      %s52 = int_to_ptr.vmem [resolvable:$true] %s51
      %57 = dma.hbm_to_vmem [thread:$0]  %s50, 4096, %s52, [#allocation6], 256, 256, 16
    $region25: #{vae_forward.1} parent=1 // pred_fallthru
      _
    // Predicated region
    $region26: #{vae_forward.1} parent=1 // pred_check
      _
    $region27: #{vae_forward.1} parent=1 // pred_check_branch
      %59 = sbr.rel (0) target = $region29
    $region28: #{vae_forward.1} parent=1 // pred_region
      _
    $region29: #{vae_forward.1} parent=1 // pred_fallthru
      _
    // Predicated region
    $region30: #{vae_forward.1} parent=1 // pred_check
      _
    $region31: #{vae_forward.1} parent=1 // pred_check_branch
      %61 = sbr.rel (0) target = $region33
    $region32: #{vae_forward.1} parent=1 // pred_region
      %63 = vsyncadd [#allocation6], 0
      %s64 = sshll.u32 %s7, 4
      %s65 = int_to_ptr.hbm [resolvable:$true] %s64
      %s66 = sshll.u32 [#allocation7], 4
      %s67 = int_to_ptr.vmem [resolvable:$true] %s66
      %72 = dma.hbm_to_vmem [thread:$0]  %s65, 2048, %s67, [#allocation6], 128, 128, 8
    $region33: #{vae_forward.1} parent=1 // pred_fallthru
      _
    // Predicated region
    $region34: #{vae_forward.1} parent=1 // pred_check
      _
    $region35: #{vae_forward.1} parent=1 // pred_check_branch
      %74 = sbr.rel (0) target = $region37
    $region36: #{vae_forward.1} parent=1 // pred_region
      _
    $region37: #{vae_forward.1} parent=1 // pred_fallthru
      _
    // Predicated region
    $region38: #{vae_forward.1} parent=1 // pred_check
      _
    $region39: #{vae_forward.1} parent=1 // pred_check_branch
      %76 = sbr.rel (0) target = $region41
    $region40: #{vae_forward.1} parent=1 // pred_region
      %78 = vsyncadd [#allocation9], 0
      %s79 = sshll.u32 %s9, 4
      %s80 = int_to_ptr.hbm [resolvable:$true] %s79
      %s81 = sshll.u32 [#allocation8], 4
      %s82 = int_to_ptr.vmem [resolvable:$true] %s81
      %87 = dma.hbm_to_vmem [thread:$0]  %s80, 2048, %s82, [#allocation9], 128, 128, 8
    $region41: #{vae_forward.1} parent=1 // pred_fallthru
      _
    // Predicated region
    $region42: #{vae_forward.1} parent=1 // pred_check
      _
    $region43: #{vae_forward.1} parent=1 // pred_check_branch
      %89 = sbr.rel (0) target = $region45
    $region44: #{vae_forward.1} parent=1 // pred_region
      _
    $region45: #{vae_forward.1} parent=1 // pred_fallthru
      _
    // Predicated region
    $region46: #{vae_forward.1} parent=1 // pred_check
      _
    $region47: #{vae_forward.1} parent=1 // pred_check_branch
      %91 = sbr.rel (0) target = $region49
    $region48: #{vae_forward.1} parent=1 // pred_region
      _
    $region49: #{vae_forward.1} parent=1 // pred_fallthru
      _
    // Predicated region
    $region50: #{vae_forward.1} parent=1 // pred_check
      _
    $region51: #{vae_forward.1} parent=1 // pred_check_branch
      %93 = sbr.rel (0) target = $region53
    $region52: #{vae_forward.1} parent=1 // pred_region
      _
    $region53: #{vae_forward.1} parent=1 // pred_fallthru
      _
    // Predicated region
    $region54: #{vae_forward.1} parent=1 // pred_check
      _
    $region55: #{vae_forward.1} parent=1 // pred_check_branch
      %95 = sbr.rel (0) target = $region57
    $region56: #{vae_forward.1} parent=1 // pred_region
      %97 = dma.done [#allocation3], 2048
    $region57: #{vae_forward.1} parent=1 // pred_fallthru
      _
    // Predicated region
    $region58: #{vae_forward.1} parent=1 // pred_check
      _
    $region59: #{vae_forward.1} parent=1 // pred_check_branch
      %99 = sbr.rel (0) target = $region61
    $region60: #{vae_forward.1} parent=1 // pred_region
      %101 = dma.done [#allocation6], 4096
    $region61: #{vae_forward.1} parent=1 // pred_fallthru
      _
    // Predicated region
    $region62: #{vae_forward.1} parent=1 // pred_check
      _
    $region63: #{vae_forward.1} parent=1 // pred_check_branch
      %103 = sbr.rel (0) target = $region65
    $region64: #{vae_forward.1} parent=1 // pred_region
      %105 = dma.done [#allocation6], 2048
    $region65: #{vae_forward.1} parent=1 // pred_fallthru
      _
    // Predicated region
    $region66: #{vae_forward.1} parent=1 // pred_check
      _
    $region67: #{vae_forward.1} parent=1 // pred_check_branch
      %107 = sbr.rel (0) target = $region69
    $region68: #{vae_forward.1} parent=1 // pred_region
      %109 = dma.done [#allocation9], 2048
    $region69: #{vae_forward.1} parent=1 // pred_fallthru
      _
    %v110 = vld [vmem:[%s0] sm:$0xff]
    %v111 = vld [vmem:[#allocation2] sm:$0xff]
    %v112 = vld [vmem:[#allocation2 + $0x8] sm:$0xff]
    %v113 = vld [vmem:[#allocation2 + $0x10] sm:$0xff]
    %v114 = vld [vmem:[#allocation2 + $0x18] sm:$0xff]
    %v115 = vld [vmem:[#allocation2 + $0x20] sm:$0xff]
    %v116 = vld [vmem:[#allocation2 + $0x28] sm:$0xff]
    %v117 = vld [vmem:[#allocation2 + $0x30] sm:$0xff]
    %v118 = vld [vmem:[#allocation2 + $0x38] sm:$0xff]
    %v119 = vld [vmem:[#allocation2 + $0x40] sm:$0xff]
    %v120 = vld [vmem:[#allocation2 + $0x48] sm:$0xff]
    %v121 = vld [vmem:[#allocation2 + $0x50] sm:$0xff]
    %v122 = vld [vmem:[#allocation2 + $0x58] sm:$0xff]
    %v123 = vld [vmem:[#allocation2 + $0x60] sm:$0xff]
    %v124 = vld [vmem:[#allocation2 + $0x68] sm:$0xff]
    %v125 = vld [vmem:[#allocation2 + $0x70] sm:$0xff]
    %v126 = vld [vmem:[#allocation2 + $0x78] sm:$0xff]
    %v127 = vld [vmem:[%s2] sm:$0x1]
    %v129 = vperm.slane %v127, 0
    %131 = vmatpush.msra.mxu0 %v126
    %132 = vmatpush.msra.mxu0 %v125
    %133 = vmatpush.msra.mxu0 %v124
    %134 = vmatpush.msra.mxu0 %v123
    %135 = vmatpush.msra.mxu0 %v122
    %136 = vmatpush.msra.mxu0 %v121
    %137 = vmatpush.msra.mxu0 %v120
    %138 = vmatpush.msra.mxu0 %v119
    %139 = vmatpush.msra.mxu0 %v118
    %140 = vmatpush.msra.mxu0 %v117
    %141 = vmatpush.msra.mxu0 %v116
    %142 = vmatpush.msra.mxu0 %v115
    %143 = vmatpush.msra.mxu0 %v114
    %144 = vmatpush.msra.mxu0 %v113
    %145 = vmatpush.msra.mxu0 %v112
    %146 = vmatpush.msra.mxu0 %v111
    %147 = vmatmul.f32.gmra.mxu0 %v110
    %v148 = vpop.f32.mrf.mxu0
    %v149 = vadd.f32 %v129, %v148
    %150 = vdwg.mxu0
    %v151 = vmax.f32 %v149, 0.0
    %v152 = vrot.slane %v151, 4
    %v153 = vadd.f32 %v151, %v152
    %v154 = vrot.slane %v153, 2
    %v155 = vadd.f32 %v153, %v154
    %v156 = vrot.slane %v155, 1
    %v157 = vadd.f32 %v155, %v156
    %v158 = vrcp.pop 8.0
    %v159 = vmul.f32 8.0, %v158
    %v160 = vsub.f32 1.0, %v159
    %v161 = vmul.f32 %v158, %v160
    %v162 = vadd.f32 %v158, %v161
    %vm163 = vweird.f32 %v158
    %v164 = vsel %vm163, %v158, %v162
    %v165 = vmul.f32 %v157, %v164
    %v166 = vsub.f32 %v151, %v165
    %v167 = vmul.f32 %v166, %v166
    %v168 = vrot.slane %v167, 4
    %v169 = vadd.f32 %v167, %v168
    %v170 = vrot.slane %v169, 2
    %v171 = vadd.f32 %v169, %v170
    %v172 = vrot.slane %v171, 1
    %v173 = vadd.f32 %v171, %v172
    %v174 = vmul.f32 %v173, %v164
    %v175 = vadd.f32 %v174, 1e-05
    %v176 = vrsqrt.pop %v175
    %v177 = vmul.f32 %v176, %v175
    %v178 = vmul.f32 %v177, %v176
    %v179 = vmul.f32 0.5, %v178
    %v180 = vsub.f32 1.5, %v179
    %v181 = vmul.f32 %v176, %v180
    %vm182 = vweird.f32 %v175
    %vm183 = vweird.f32 %v176
    %vm184 = vmor %vm182, %vm183
    %v185 = vsel %vm184, %v176, %v181
    %v186 = vmul.f32 %v166, %v185
    %v187 = vld [vmem:[%s3] sm:$0x1]
    %v189 = vperm.slane %v187, 0
    %v191 = vmul.f32 %v186, %v189
    %v192 = vld [vmem:[%s4] sm:$0x1]
    %v194 = vperm.slane %v192, 0
    %v196 = vadd.f32 %v191, %v194
    %v197 = vld [vmem:[#allocation5] sm:$0xff]
    %v198 = vld [vmem:[#allocation5 + $0x8] sm:$0xff]
    %v199 = vld [vmem:[#allocation5 + $0x10] sm:$0xff]
    %v200 = vld [vmem:[#allocation5 + $0x18] sm:$0xff]
    %v201 = vld [vmem:[#allocation5 + $0x20] sm:$0xff]
    %v202 = vld [vmem:[#allocation5 + $0x28] sm:$0xff]
    %v203 = vld [vmem:[#allocation5 + $0x30] sm:$0xff]
    %v204 = vld [vmem:[#allocation5 + $0x38] sm:$0xff]
    %v205 = vld [vmem:[#allocation5 + $0x40] sm:$0xff]
    %v206 = vld [vmem:[#allocation5 + $0x48] sm:$0xff]
    %v207 = vld [vmem:[#allocation5 + $0x50] sm:$0xff]
    %v208 = vld [vmem:[#allocation5 + $0x58] sm:$0xff]
    %v209 = vld [vmem:[#allocation5 + $0x60] sm:$0xff]
    %v210 = vld [vmem:[#allocation5 + $0x68] sm:$0xff]
    %v211 = vld [vmem:[#allocation5 + $0x70] sm:$0xff]
    %v212 = vld [vmem:[#allocation5 + $0x78] sm:$0xff]
    %v213 = vld [vmem:[#allocation5 + $0x80] sm:$0xff]
    %v214 = vld [vmem:[#allocation5 + $0x88] sm:$0xff]
    %v215 = vld [vmem:[#allocation5 + $0x90] sm:$0xff]
    %v216 = vld [vmem:[#allocation5 + $0x98] sm:$0xff]
    %v217 = vld [vmem:[#allocation5 + $0xa0] sm:$0xff]
    %v218 = vld [vmem:[#allocation5 + $0xa8] sm:$0xff]
    %v219 = vld [vmem:[#allocation5 + $0xb0] sm:$0xff]
    %v220 = vld [vmem:[#allocation5 + $0xb8] sm:$0xff]
    %v221 = vld [vmem:[#allocation5 + $0xc0] sm:$0xff]
    %v222 = vld [vmem:[#allocation5 + $0xc8] sm:$0xff]
    %v223 = vld [vmem:[#allocation5 + $0xd0] sm:$0xff]
    %v224 = vld [vmem:[#allocation5 + $0xd8] sm:$0xff]
    %v225 = vld [vmem:[#allocation5 + $0xe0] sm:$0xff]
    %v226 = vld [vmem:[#allocation5 + $0xe8] sm:$0xff]
    %v227 = vld [vmem:[#allocation5 + $0xf0] sm:$0xff]
    %v228 = vld [vmem:[#allocation5 + $0xf8] sm:$0xff]
    %v229 = vld [vmem:[%s6] sm:$0x3]
    %v231 = vperm.slane %v229, 0
    %v232 = vperm.slane %v229, 1
    %235 = vmatpush.msra.mxu0 %v227
    %236 = vmatpush.msra.mxu0 %v225
    %237 = vmatpush.msra.mxu0 %v223
    %238 = vmatpush.msra.mxu0 %v221
    %239 = vmatpush.msra.mxu0 %v219
    %240 = vmatpush.msra.mxu0 %v217
    %241 = vmatpush.msra.mxu0 %v215
    %242 = vmatpush.msra.mxu0 %v213
    %243 = vmatpush.msra.mxu0 %v211
    %244 = vmatpush.msra.mxu0 %v209
    %245 = vmatpush.msra.mxu0 %v207
    %246 = vmatpush.msra.mxu0 %v205
    %247 = vmatpush.msra.mxu0 %v203
    %248 = vmatpush.msra.mxu0 %v201
    %249 = vmatpush.msra.mxu0 %v199
    %250 = vmatpush.msra.mxu0 %v197
    %251 = vmatmul.f32.gmra.mxu0 %v196
    %v252 = vpop.f32.mrf.mxu0
    %v253 = vadd.f32 %v231, %v252
    %254 = vdwg.mxu0
    %255 = vmatpush.msra.mxu0 %v228
    %256 = vmatpush.msra.mxu0 %v226
    %257 = vmatpush.msra.mxu0 %v224
    %258 = vmatpush.msra.mxu0 %v222
    %259 = vmatpush.msra.mxu0 %v220
    %260 = vmatpush.msra.mxu0 %v218
    %261 = vmatpush.msra.mxu0 %v216
    %262 = vmatpush.msra.mxu0 %v214
    %263 = vmatpush.msra.mxu0 %v212
    %264 = vmatpush.msra.mxu0 %v210
    %265 = vmatpush.msra.mxu0 %v208
    %266 = vmatpush.msra.mxu0 %v206
    %267 = vmatpush.msra.mxu0 %v204
    %268 = vmatpush.msra.mxu0 %v202
    %269 = vmatpush.msra.mxu0 %v200
    %270 = vmatpush.msra.mxu0 %v198
    %271 = vmatmul.f32.gmra.mxu0 %v196
    %v272 = vpop.f32.mrf.mxu0
    %v273 = vadd.f32 %v232, %v272
    %274 = vdwg.mxu0
    %v275 = vmul.f32 %v273, 0.5
    %v276 = vmul.f32 %v275, 1.442695
    %v277 = vpow.pop %v276
    %v278 = vadd.f32 %v273, 1.0
    %v279 = vmul.f32 %v253, %v253
    %v280 = vsub.f32 %v278, %v279
    %v281 = vmul.f32 %v277, %v277
    %v282 = vsub.f32 %v280, %v281
    %283 = vadd.xlane.f32.xlu0 %v282
    %v284 = vpop.xlane.xlu0 %283
    %v285 = vrot.slane %v284, 4
    %v286 = vadd.f32 %v284, %v285
    %v287 = vrot.slane %v286, 2
    %v288 = vadd.f32 %v286, %v287
    %v289 = vrot.slane %v288, 1
    %v290 = vadd.f32 %v288, %v289
    %s291 = vtos %v290
    %s292 = smul.f32 %s291, 0.5
    %v293 = vld [vmem:[%s11] sm:$0xff]
    %v294 = vmul.f32 %v293, %v277
    %v295 = vadd.f32 %v253, %v294
    %v296 = vld [vmem:[#allocation7] sm:$0xff]
    %v297 = vld [vmem:[#allocation7 + $0x8] sm:$0xff]
    %v298 = vld [vmem:[#allocation7 + $0x10] sm:$0xff]
    %v299 = vld [vmem:[#allocation7 + $0x18] sm:$0xff]
    %v300 = vld [vmem:[#allocation7 + $0x20] sm:$0xff]
    %v301 = vld [vmem:[#allocation7 + $0x28] sm:$0xff]
    %v302 = vld [vmem:[#allocation7 + $0x30] sm:$0xff]
    %v303 = vld [vmem:[#allocation7 + $0x38] sm:$0xff]
    %v304 = vld [vmem:[#allocation7 + $0x40] sm:$0xff]
    %v305 = vld [vmem:[#allocation7 + $0x48] sm:$0xff]
    %v306 = vld [vmem:[#allocation7 + $0x50] sm:$0xff]
    %v307 = vld [vmem:[#allocation7 + $0x58] sm:$0xff]
    %v308 = vld [vmem:[#allocation7 + $0x60] sm:$0xff]
    %v309 = vld [vmem:[#allocation7 + $0x68] sm:$0xff]
    %v310 = vld [vmem:[#allocation7 + $0x70] sm:$0xff]
    %v311 = vld [vmem:[#allocation7 + $0x78] sm:$0xff]
    %v312 = vld [vmem:[%s8] sm:$0x1]
    %v314 = vperm.slane %v312, 0
    %316 = vmatpush.msra.mxu0 %v311
    %317 = vmatpush.msra.mxu0 %v310
    %318 = vmatpush.msra.mxu0 %v309
    %319 = vmatpush.msra.mxu0 %v308
    %320 = vmatpush.msra.mxu0 %v307
    %321 = vmatpush.msra.mxu0 %v306
    %322 = vmatpush.msra.mxu0 %v305
    %323 = vmatpush.msra.mxu0 %v304
    %324 = vmatpush.msra.mxu0 %v303
    %325 = vmatpush.msra.mxu0 %v302
    %326 = vmatpush.msra.mxu0 %v301
    %327 = vmatpush.msra.mxu0 %v300
    %328 = vmatpush.msra.mxu0 %v299
    %329 = vmatpush.msra.mxu0 %v298
    %330 = vmatpush.msra.mxu0 %v297
    %331 = vmatpush.msra.mxu0 %v296
    %332 = vmatmul.f32.gmra.mxu0 %v295
    %v333 = vpop.f32.mrf.mxu0
    %v334 = vadd.f32 %v314, %v333
    %335 = vdwg.mxu0
    %v336 = vmax.f32 %v334, 0.0
    %v337 = vld [vmem:[%s12] sm:$0xff]
    %v338 = vmul.f32 %v336, %v337
    %v339 = vld [vmem:[#allocation8] sm:$0xff]
    %v340 = vld [vmem:[#allocation8 + $0x8] sm:$0xff]
    %v341 = vld [vmem:[#allocation8 + $0x10] sm:$0xff]
    %v342 = vld [vmem:[#allocation8 + $0x18] sm:$0xff]
    %v343 = vld [vmem:[#allocation8 + $0x20] sm:$0xff]
    %v344 = vld [vmem:[#allocation8 + $0x28] sm:$0xff]
    %v345 = vld [vmem:[#allocation8 + $0x30] sm:$0xff]
    %v346 = vld [vmem:[#allocation8 + $0x38] sm:$0xff]
    %v347 = vld [vmem:[#allocation8 + $0x40] sm:$0xff]
    %v348 = vld [vmem:[#allocation8 + $0x48] sm:$0xff]
    %v349 = vld [vmem:[#allocation8 + $0x50] sm:$0xff]
    %v350 = vld [vmem:[#allocation8 + $0x58] sm:$0xff]
    %v351 = vld [vmem:[#allocation8 + $0x60] sm:$0xff]
    %v352 = vld [vmem:[#allocation8 + $0x68] sm:$0xff]
    %v353 = vld [vmem:[#allocation8 + $0x70] sm:$0xff]
    %v354 = vld [vmem:[#allocation8 + $0x78] sm:$0xff]
    %v355 = vld [vmem:[%s10] sm:$0x1]
    %v357 = vperm.slane %v355, 0
    %359 = vmatpush.msra.mxu0 %v354
    %360 = vmatpush.msra.mxu0 %v353
    %361 = vmatpush.msra.mxu0 %v352
    %362 = vmatpush.msra.mxu0 %v351
    %363 = vmatpush.msra.mxu0 %v350
    %364 = vmatpush.msra.mxu0 %v349
    %365 = vmatpush.msra.mxu0 %v348
    %366 = vmatpush.msra.mxu0 %v347
    %367 = vmatpush.msra.mxu0 %v346
    %368 = vmatpush.msra.mxu0 %v345
    %369 = vmatpush.msra.mxu0 %v344
    %370 = vmatpush.msra.mxu0 %v343
    %371 = vmatpush.msra.mxu0 %v342
    %372 = vmatpush.msra.mxu0 %v341
    %373 = vmatpush.msra.mxu0 %v340
    %374 = vmatpush.msra.mxu0 %v339
    %375 = vmatmul.f32.gmra.mxu0 %v338
    %v376 = vpop.f32.mrf.mxu0
    %v377 = vadd.f32 %v357, %v376
    %378 = vdwg.mxu0
    %v379 = vmax.f32 %v377, 0.0
    %v380 = vand.u32 2147483647, %v377
    %v381 = vsub.f32 0.0, %v380
    %v382 = vmul.f32 %v381, 1.442695
    %v383 = vpow.pop %v382
    %v384 = vadd.f32 %v383, 1.0
    %v385 = vlog2.pop %v384
    %v386 = vmul.f32 %v385, 0.6931472
    %v387 = vadd.f32 %v379, %v386
    %v388 = vlaneseq
    %v389 = vand.u32 %v388, 127
    %vm390 = vcmp.lt.s32.totalorder %v389, 16
    %v391 = vmul.f32 %v110, %v377
    %v392 = vsel %vm390, %v387, 0.0
    %v393 = vsub.f32 %v391, %v392
    %394 = vadd.xlane.f32.xlu0 %v393
    %v395 = vpop.xlane.xlu0 %394
    %v396 = vrot.slane %v395, 4
    %v397 = vadd.f32 %v395, %v396
    %v398 = vrot.slane %v397, 2
    %v399 = vadd.f32 %v397, %v398
    %v400 = vrot.slane %v399, 1
    %v401 = vadd.f32 %v399, %v400
    %s402 = vtos %v401
    %v403 = vrcp.pop 128.0
    %v404 = vmul.f32 128.0, %v403
    %v405 = vsub.f32 1.0, %v404
    %v406 = vmul.f32 %v403, %v405
    %v407 = vadd.f32 %v403, %v406
    %vm408 = vweird.f32 %v403
    %v409 = vsel %vm408, %v403, %v407
    %s410 = vtos %v409
    %s411 = smul.f32 %s402, %s410
    %s412 = sadd.f32 %s292, %s411
    %s413 = ssub.f32 0.0, %s412
    %v414 = vsub.f32 %v377, %v387
    %v415 = vmul.f32 %v414, 1.442695
    %v416 = vpow.pop %v415
    %417 = vst [vmem:[#allocation10] sm:$0xff] %v416
    %vm418 = vcmp.eq.s32.totalorder %v389, 4
    %v419 = vstv %s413
    %v420 = vsel %vm418, %v419, 0.0
    %v421 = vadd.f32 %v295, %v420
    %422 = vst [vmem:[%s13] sm:$0xff] %v421
    // Predicated region
    $region70: #{vae_forward.1} parent=1 // pred_check
      _
    $region71: #{vae_forward.1} parent=1 // pred_check_branch
      %424 = sbr.rel (0) target = $region73
    $region72: #{vae_forward.1} parent=1 // pred_region
      _
    $region73: #{vae_forward.1} parent=1 // pred_fallthru
      _
    // Predicated region
    $region74: #{vae_forward.1} parent=1 // pred_check
      _
    $region75: #{vae_forward.1} parent=1 // pred_check_branch
      %426 = sbr.rel (0) target = $region77
    $region76: #{vae_forward.1} parent=1 // pred_region
      %428 = vsyncadd [#allocation4], 0
      %s430 = sshll.u32 [#allocation10], 4
      %s431 = int_to_ptr.vmem [resolvable:$true] %s430
      %s432 = sshll.u32 %s14, 4
      %s433 = int_to_ptr.hbm [resolvable:$true] %s432
      %435 = dma.vmem_to_hbm [thread:$0]  %s431, 128, %s433, [#allocation4]
    $region77: #{vae_forward.1} parent=1 // pred_fallthru
      _
    // Predicated region
    $region78: #{vae_forward.1} parent=1 // pred_check
      _
    $region79: #{vae_forward.1} parent=1 // pred_check_branch
      %437 = sbr.rel (0) target = $region81
    $region80: #{vae_forward.1} parent=1 // pred_region
      _
    $region81: #{vae_forward.1} parent=1 // pred_fallthru
      _
    // Predicated region
    $region82: #{vae_forward.1} parent=1 // pred_check
      _
    $region83: #{vae_forward.1} parent=1 // pred_check_branch
      %439 = sbr.rel (0) target = $region85
    $region84: #{vae_forward.1} parent=1 // pred_region
      %441 = dma.done [#allocation4], 128
    $region85: #{vae_forward.1} parent=1 // pred_fallthru
      _
    %442 = vsyncpa [#allocation3], 1
    %443 = vsyncpa [#allocation6], 1
    %444 = vsyncpa [#allocation9], 1
    %445 = vsyncpa [#allocation4], 1

</llo_original>
